<compile_context>
chip_gen: v5e
topology: v5e:2x2
jax: 0.10.0
libtpu: 0.0.40
codegen_flags: <defaults>
</compile_context>

<pallas_src>
import jax
import jax.numpy as jnp
from jax.experimental import pallas as pl
from jax.experimental.pallas import tpu as pltpu

LN_EPS = 1e-5
_INV_SQRT2 = 0.7071067811865476


def _round_up(x, m):
    return (x + m - 1) // m * m


# --------------------------------------------------------------------------
# Kernel A: dense -> GELU -> LayerNorm   (per token tile, bf16 activations)
# --------------------------------------------------------------------------
def _dense_gelu_ln_kernel(h_ref, w1_ref, b1_ref, g_ref, beta_ref, act_ref):
    # bf16 [tm, D] @ bf16 [D, D] -> f32 acc, + f32 bias
    x = jnp.dot(h_ref[...], w1_ref[...],
                preferred_element_type=jnp.float32) + b1_ref[...]

    # exact (erf-based) GELU — matches torch.nn.GELU() default
    x = 0.5 * x * (1.0 + jax.lax.erf(x * jnp.float32(_INV_SQRT2)))

    # LayerNorm over the feature dim, f32 statistics
    mean = jnp.mean(x, axis=-1, keepdims=True)
    var = jnp.mean(jnp.square(x - mean), axis=-1, keepdims=True)
    x = (x - mean) * jax.lax.rsqrt(var + LN_EPS)
    x = x * g_ref[...] + beta_ref[...]

    act_ref[...] = x.astype(act_ref.dtype)


# --------------------------------------------------------------------------
# Kernel B: decoder matmul + bias  (vocab-outer / token-inner grid)
# --------------------------------------------------------------------------
def _decoder_kernel(a_ref, w2_ref, b2_ref, out_ref):
    logits = jnp.dot(a_ref[...], w2_ref[...],
                     preferred_element_type=jnp.float32) + b2_ref[...]
    out_ref[...] = logits.astype(out_ref.dtype)


# --------------------------------------------------------------------------
# Parameter preparation (hoisted out of the per-call path)
# --------------------------------------------------------------------------
def _pick_tn(V):
    """Lane-dense vocab tile minimizing padding waste (ties -> larger tile)."""
    if V <= 2048:
        return _round_up(V, 128)
    cands = (2048, 1792, 1536, 1280, 1024)
    return min(cands, key=lambda t: (_round_up(V, t) - V, -t))


def prepare_mlm_head_params(params, *, tn=None):
    """One-time cast to bf16 / f32 and vocab padding of the head weights.

    Call once (e.g. at model init); reuse the result for every forward pass
    so the ~2*D*V-byte cast/pad traffic is not paid per call.
    """
    D = params["w_dense"].shape[0]
    V = params["w_dec"].shape[1]
    if tn is None:
        tn = _pick_tn(V)
    V_pad = _round_up(V, tn)

    w2 = params["w_dec"].astype(jnp.bfloat16)
    b2 = params["b_dec"].reshape(1, V).astype(jnp.float32)
    if V_pad != V:
        w2 = jnp.pad(w2, ((0, 0), (0, V_pad - V)))
        b2 = jnp.pad(b2, ((0, 0), (0, V_pad - V)))

    return {
        "w1": params["w_dense"].astype(jnp.bfloat16),
        "b1": params["b_dense"].reshape(1, D).astype(jnp.float32),
        "gamma": params["ln_gamma"].reshape(1, D).astype(jnp.float32),
        "beta": params["ln_beta"].reshape(1, D).astype(jnp.float32),
        "w2": w2,
        "b2": b2,
        "vocab_size": V,
        "tn": tn,
    }


# --------------------------------------------------------------------------
# Forward pass
# --------------------------------------------------------------------------
def bert_mlm_head(hidden_states, prepared, *, tm=None,
                  logits_dtype=jnp.bfloat16):
    """hidden_states: [B, S, D] -> logits [B, S, V] (dtype = logits_dtype)."""
    B, S, D = hidden_states.shape
    V = prepared["vocab_size"]
    tn = prepared["tn"]
    V_pad = prepared["w2"].shape[1]
    M = B * S

    # Token tile: large (multiple of 256) to fill the MXU and amortize the
    # ~0.35 us per-grid-step overhead.
    if tm is None:
        tm = 512 if M >= 512 else _round_up(M, 8)
    M_pad = _round_up(M, tm)

    h2d = hidden_states.reshape(M, D).astype(jnp.bfloat16)
    if M_pad != M:
        h2d = jnp.pad(h2d, ((0, M_pad - M), (0, 0)))

    # ---- Kernel A: dense + GELU + LayerNorm, computed exactly once --------
    act = pl.pallas_call(
        _dense_gelu_ln_kernel,
        out_shape=jax.ShapeDtypeStruct((M_pad, D), jnp.bfloat16),
        grid_spec=pltpu.PrefetchScalarGridSpec(
            num_scalar_prefetch=0,
            grid=(M_pad // tm,),
            in_specs=[
                pl.BlockSpec((tm, D), lambda i: (i, 0)),   # hidden tokens
                pl.BlockSpec((D, D), lambda i: (0, 0)),    # dense weight
                pl.BlockSpec((1, D), lambda i: (0, 0)),    # dense bias
                pl.BlockSpec((1, D), lambda i: (0, 0)),    # LN gamma
                pl.BlockSpec((1, D), lambda i: (0, 0)),    # LN beta
            ],
            out_specs=pl.BlockSpec((tm, D), lambda i: (i, 0)),
        ),
        compiler_params=pltpu.CompilerParams(
            dimension_semantics=("parallel",),
        ),
    )(h2d, prepared["w1"], prepared["b1"], prepared["gamma"], prepared["beta"])

    # ---- Kernel B: decoder matmul + bias ----------------------------------
    # grid = (vocab tiles [outer], token tiles [inner]); the decoder-weight
    # tile index only changes with the outer axis, so w_dec is streamed from
    # HBM once per vocab sweep. Vocab axis is "parallel" / token axis
    # "arbitrary" so a v7x megacore split lands on vocab (w_dec streamed once
    # per chip, not once per core).
    grid = (V_pad // tn, M_pad // tm)
    out = pl.pallas_call(
        _decoder_kernel,
        out_shape=jax.ShapeDtypeStruct((M_pad, V_pad), logits_dtype),
        grid_spec=pltpu.PrefetchScalarGridSpec(
            num_scalar_prefetch=0,
            grid=grid,
            in_specs=[
                pl.BlockSpec((tm, D), lambda j, i: (i, 0)),   # activations
                pl.BlockSpec((D, tn), lambda j, i: (0, j)),   # decoder weight
                pl.BlockSpec((1, tn), lambda j, i: (0, j)),   # decoder bias
            ],
            out_specs=pl.BlockSpec((tm, tn), lambda j, i: (i, j)),
        ),
        compiler_params=pltpu.CompilerParams(
            dimension_semantics=("parallel", "arbitrary"),
            vmem_limit_bytes=48 * 1024 * 1024,   # headroom under v7x 64 MiB
        ),
    )(act, prepared["w2"], prepared["b2"])

    return out[:M, :V].reshape(B, S, V)


# --------------------------------------------------------------------------
# Pure-JAX reference (mirrors the PyTorch module in f32)
# --------------------------------------------------------------------------
def reference_mlm_head(hidden_states, params):
    x = hidden_states.astype(jnp.float32)
    x = x @ params["w_dense"] + params["b_dense"]
    x = 0.5 * x * (1.0 + jax.lax.erf(x / jnp.sqrt(2.0)))
    mean = jnp.mean(x, axis=-1, keepdims=True)
    var = jnp.mean(jnp.square(x - mean), axis=-1, keepdims=True)
    x = (x - mean) * jax.lax.rsqrt(var + LN_EPS)
    x = x * params["ln_gamma"] + params["ln_beta"]
    return x @ params["w_dec"] + params["b_dec"]


if __name__ == "__main__":
    # Small config consistent with the module: d_model=32, vocab_size=128
    B, S, D, V = 2, 8, 32, 128

    key = jax.random.PRNGKey(0)
    k_h, k_w1, k_b1, k_w2, k_b2 = jax.random.split(key, 5)

    hidden_states = jax.random.normal(k_h, (B, S, D), dtype=jnp.float32)

    params = {
        # stored as [in, out]  (transposed vs. torch's nn.Linear weight)
        "w_dense": jax.random.normal(k_w1, (D, D), dtype=jnp.float32) * 0.05,
        "b_dense": jax.random.normal(k_b1, (D,), dtype=jnp.float32) * 0.01,
        "ln_gamma": jnp.ones((D,), dtype=jnp.float32),
        "ln_beta": jnp.zeros((D,), dtype=jnp.float32),
        "w_dec": jax.random.normal(k_w2, (D, V), dtype=jnp.float32) * 0.05,
        "b_dec": jax.random.normal(k_b2, (V,), dtype=jnp.float32) * 0.01,
    }

    # One-time weight preparation (cast/pad hoisted out of the call path).
    prepared = prepare_mlm_head_params(params)

    logits = bert_mlm_head(hidden_states, prepared)
    logits = jax.block_until_ready(logits)

    ref = reference_mlm_head(hidden_states, params)
    assert logits.shape == (B, S, V)
    # bf16 matmuls / bf16 activation storage / bf16 logits -> loosened
    # tolerance vs the f32 reference.
    err = jnp.max(jnp.abs(logits.astype(jnp.float32) - ref))
    assert jnp.allclose(logits.astype(jnp.float32), ref, atol=5e-2, rtol=5e-2), (
        "max abs err %f" % float(err))

    print("KERNEL_OK")
</pallas_src>

<mosaic_0001>
module attributes {stable_mosaic.version = 11 : i64} {
  func.func @_dense_gelu_ln_kernel(%arg0: i32, %arg1: memref<16x32xbf16, #tpu.memory_space<vmem>>, %arg2: memref<32x32xbf16, #tpu.memory_space<vmem>>, %arg3: memref<1x32xf32, #tpu.memory_space<vmem>>, %arg4: memref<1x32xf32, #tpu.memory_space<vmem>>, %arg5: memref<1x32xf32, #tpu.memory_space<vmem>>, %arg6: memref<16x32xbf16, #tpu.memory_space<vmem>>) attributes {dimension_semantics = [#tpu.dimension_semantics<parallel>], iteration_bounds = array<i64: 1>, scalar_prefetch = 0 : i64, scratch_operands = 0 : i64, tpu.core_type = #tpu.core_type<tc>, window_params = [{transform_indices = @transform_0, window_bounds = array<i64: 16, 32>}, {pipeline_mode = #tpu.pipeline_mode<synchronous>, transform_indices = @transform_1, window_bounds = array<i64: 32, 32>}, {pipeline_mode = #tpu.pipeline_mode<synchronous>, transform_indices = @transform_2, window_bounds = array<i64: 1, 32>}, {pipeline_mode = #tpu.pipeline_mode<synchronous>, transform_indices = @transform_3, window_bounds = array<i64: 1, 32>}, {pipeline_mode = #tpu.pipeline_mode<synchronous>, transform_indices = @transform_4, window_bounds = array<i64: 1, 32>}, {transform_indices = @transform_5, window_bounds = array<i64: 16, 32>}]} {
    %c0 = arith.constant 0 : index
    %c0_0 = arith.constant 0 : index
    %0 = vector.load %arg1[%c0, %c0_0] : memref<16x32xbf16, #tpu.memory_space<vmem>>, vector<16x32xbf16>
    %c0_1 = arith.constant 0 : index
    %c0_2 = arith.constant 0 : index
    %1 = vector.load %arg2[%c0_1, %c0_2] : memref<32x32xbf16, #tpu.memory_space<vmem>>, vector<32x32xbf16>
    %cst = arith.constant dense<0.000000e+00> : vector<16x32xf32>
    %2 = tpu.matmul %0, %1, %cst {dimension_numbers = #tpu.dot_dimension_numbers<[1], [0], [0], [1], [0, 0, 1, 1], [], []>} : vector<16x32xbf16>, vector<32x32xbf16>, vector<16x32xf32> -> vector<16x32xf32>
    %c0_3 = arith.constant 0 : index
    %c0_4 = arith.constant 0 : index
    %3 = vector.load %arg3[%c0_3, %c0_4] : memref<1x32xf32, #tpu.memory_space<vmem>>, vector<1x32xf32>
    %4 = vector.broadcast %3 : vector<1x32xf32> to vector<16x32xf32>
    %5 = arith.addf %2, %4 : vector<16x32xf32>
    %cst_5 = arith.constant 5.000000e-01 : f32
    %6 = vector.broadcast %cst_5 : f32 to vector<16x32xf32>
    %7 = arith.mulf %6, %5 : vector<16x32xf32>
    %cst_6 = arith.constant 0.707106769 : f32
    %8 = vector.broadcast %cst_6 : f32 to vector<16x32xf32>
    %9 = arith.mulf %5, %8 : vector<16x32xf32>
    %10 = math.erf %9 : vector<16x32xf32>
    %cst_7 = arith.constant 1.000000e+00 : f32
    %11 = vector.broadcast %cst_7 : f32 to vector<16x32xf32>
    %12 = arith.addf %11, %10 : vector<16x32xf32>
    %13 = arith.mulf %7, %12 : vector<16x32xf32>
    %cst_8 = arith.constant dense<0.000000e+00> : vector<16xf32>
    %14 = vector.multi_reduction <add>, %13, %cst_8 [1] : vector<16x32xf32> to vector<16xf32>
    %15 = vector.shape_cast %14 : vector<16xf32> to vector<16x1xf32>
    %cst_9 = arith.constant 3.200000e+01 : f32
    %16 = vector.broadcast %cst_9 : f32 to vector<16x1xf32>
    %17 = arith.divf %15, %16 : vector<16x1xf32>
    %18 = vector.broadcast %17 : vector<16x1xf32> to vector<16x32xf32>
    %19 = arith.subf %13, %18 : vector<16x32xf32>
    %20 = arith.mulf %19, %19 : vector<16x32xf32>
    %cst_10 = arith.constant dense<0.000000e+00> : vector<16xf32>
    %21 = vector.multi_reduction <add>, %20, %cst_10 [1] : vector<16x32xf32> to vector<16xf32>
    %22 = vector.shape_cast %21 : vector<16xf32> to vector<16x1xf32>
    %cst_11 = arith.constant 3.200000e+01 : f32
    %23 = vector.broadcast %cst_11 : f32 to vector<16x1xf32>
    %24 = arith.divf %22, %23 : vector<16x1xf32>
    %25 = vector.broadcast %17 : vector<16x1xf32> to vector<16x32xf32>
    %26 = arith.subf %13, %25 : vector<16x32xf32>
    %cst_12 = arith.constant 9.99999974E-6 : f32
    %27 = vector.broadcast %cst_12 : f32 to vector<16x1xf32>
    %28 = arith.addf %24, %27 : vector<16x1xf32>
    %29 = math.rsqrt %28 : vector<16x1xf32>
    %30 = vector.broadcast %29 : vector<16x1xf32> to vector<16x32xf32>
    %31 = arith.mulf %26, %30 : vector<16x32xf32>
    %c0_13 = arith.constant 0 : index
    %c0_14 = arith.constant 0 : index
    %32 = vector.load %arg4[%c0_13, %c0_14] : memref<1x32xf32, #tpu.memory_space<vmem>>, vector<1x32xf32>
    %33 = vector.broadcast %32 : vector<1x32xf32> to vector<16x32xf32>
    %34 = arith.mulf %31, %33 : vector<16x32xf32>
    %c0_15 = arith.constant 0 : index
    %c0_16 = arith.constant 0 : index
    %35 = vector.load %arg5[%c0_15, %c0_16] : memref<1x32xf32, #tpu.memory_space<vmem>>, vector<1x32xf32>
    %36 = vector.broadcast %35 : vector<1x32xf32> to vector<16x32xf32>
    %37 = arith.addf %34, %36 : vector<16x32xf32>
    %38 = arith.truncf %37 : vector<16x32xf32> to vector<16x32xbf16>
    %c0_17 = arith.constant 0 : index
    %c0_18 = arith.constant 0 : index
    %39 = vector.load %arg6[%c0_17, %c0_18] : memref<16x32xbf16, #tpu.memory_space<vmem>>, vector<16x32xbf16>
    tpu.vector_store %arg6[%c0_17, %c0_18], %38 {strides = array<i32>} : memref<16x32xbf16, #tpu.memory_space<vmem>>, vector<16x32xbf16>,
    return
  }
  func.func @transform_0(%arg0: i32) -> (i32, i32) {
    %c0_i32 = arith.constant 0 : i32
    %c0_i32_0 = arith.constant 0 : i32
    return %arg0, %c0_i32 : i32, i32
  }
  func.func @transform_1(%arg0: i32) -> (i32, i32) {
    %c0_i32 = arith.constant 0 : i32
    %c0_i32_0 = arith.constant 0 : i32
    %c0_i32_1 = arith.constant 0 : i32
    return %c0_i32, %c0_i32_0 : i32, i32
  }
  func.func @transform_2(%arg0: i32) -> (i32, i32) {
    %c0_i32 = arith.constant 0 : i32
    %c0_i32_0 = arith.constant 0 : i32
    %c0_i32_1 = arith.constant 0 : i32
    return %c0_i32, %c0_i32_0 : i32, i32
  }
  func.func @transform_3(%arg0: i32) -> (i32, i32) {
    %c0_i32 = arith.constant 0 : i32
    %c0_i32_0 = arith.constant 0 : i32
    %c0_i32_1 = arith.constant 0 : i32
    return %c0_i32, %c0_i32_0 : i32, i32
  }
  func.func @transform_4(%arg0: i32) -> (i32, i32) {
    %c0_i32 = arith.constant 0 : i32
    %c0_i32_0 = arith.constant 0 : i32
    %c0_i32_1 = arith.constant 0 : i32
    return %c0_i32, %c0_i32_0 : i32, i32
  }
  func.func @transform_5(%arg0: i32) -> (i32, i32) {
    %c0_i32 = arith.constant 0 : i32
    %c0_i32_0 = arith.constant 0 : i32
    return %arg0, %c0_i32 : i32, i32
  }
}

</mosaic_0001>

<llo_original>
// kernel: tpu_custom_call.1
$region0: #{tpu_custom_call.1}
  #allocation0 [shape = 'u32[]', space=smem, size = 0x4, offset = 0x4, fixed_abs, tag = 'smem constant byte address 0x4 - core index']
  #allocation1 [shape = 'u32[72,128]{1,0:T(1,128)}', space=vmem, size = 0x9000, scoped, tag = 'internal scratch']
  %s0 = inlined_call_operand.hbm [shape: bf16[16,32], index: 0, kind: input, shape index: {}]
  %s1 = inlined_call_operand.hbm [shape: bf16[32,32], index: 1, kind: input, shape index: {}]
  %s2 = inlined_call_operand.vmem [shape: f32[1,32], index: 2, kind: input, shape index: {}]
  %s3 = inlined_call_operand.vmem [shape: f32[1,32], index: 3, kind: input, shape index: {}]
  %s4 = inlined_call_operand.vmem [shape: f32[1,32], index: 4, kind: input, shape index: {}]
  %s5 = inlined_call_operand.hbm [shape: bf16[16,32], index: 5, kind: output, shape index: {}]
  %s6 = sld [smem:[#allocation0]]
  $region38: #{tpu_custom_call.1} parent=0
    _
  %s8 = ssub.s32 1, %s6
  %s9 = scalar_select 0, %s8, %s6
  $region1: #{tpu_custom_call.1} parent=0
    #allocation2 [shape = 'u8[4096]{0}', space=vmem, size = 0x1000, scoped, tag = 'input window, operand 0, single buffered']
    #allocation3 [shape = 's32[1]{0}', space=sflag, size = 0x4, scoped, tag = 'scoped memory for tpu_custom_call.1']
    #allocation4 [shape = 's32[1]{0}', space=sflag, size = 0x4, scoped, tag = 'scoped memory for tpu_custom_call.1']
    #allocation5 [shape = 'u8[8192]{0}', space=vmem, size = 0x2000, scoped, tag = 'input window, operand 1, single buffered']
    #allocation6 [shape = 's32[1]{0}', space=sflag, size = 0x4, scoped, tag = 'scoped memory for tpu_custom_call.1']
    #allocation7 [shape = 'u8[4096]{0}', space=vmem, size = 0x1000, scoped, tag = 'output window, operand 0, single buffered']
    %10 = vsyncpa [#allocation3], 0
    %11 = vsyncpa [#allocation6], 0
    %12 = vsyncpa [#allocation4], 0
    // Predicated region
    $region2: #{tpu_custom_call.1} parent=1 // pred_check
      _
    $region3: #{tpu_custom_call.1} parent=1 // pred_check_branch
      %14 = sbr.rel (0) target = $region5
    $region4: #{tpu_custom_call.1} parent=1 // pred_region
      %16 = vsyncadd [#allocation3], 0
      %s17 = sshll.u32 %s0, 4
      %s18 = int_to_ptr.hbm [resolvable:$true] %s17
      %s19 = sshll.u32 [#allocation2], 4
      %s20 = int_to_ptr.vmem [resolvable:$true] %s19
      %25 = dma.hbm_to_vmem [thread:$0]  %s18, 128, %s20, [#allocation3], 64, 64, 4
    $region5: #{tpu_custom_call.1} parent=1 // pred_fallthru
      _
    // Predicated region
    $region6: #{tpu_custom_call.1} parent=1 // pred_check
      _
    $region7: #{tpu_custom_call.1} parent=1 // pred_check_branch
      %27 = sbr.rel (0) target = $region9
    $region8: #{tpu_custom_call.1} parent=1 // pred_region
      %29 = vsyncadd [#allocation6], 0
      %s30 = sshll.u32 %s1, 4
      %s31 = int_to_ptr.hbm [resolvable:$true] %s30
      %s32 = sshll.u32 [#allocation5], 4
      %s33 = int_to_ptr.vmem [resolvable:$true] %s32
      %38 = dma.hbm_to_vmem [thread:$0]  %s31, 256, %s33, [#allocation6], 64, 64, 4
    $region9: #{tpu_custom_call.1} parent=1 // pred_fallthru
      _
    // Predicated region
    $region10: #{tpu_custom_call.1} parent=1 // pred_check
      _
    $region11: #{tpu_custom_call.1} parent=1 // pred_check_branch
      %40 = sbr.rel (0) target = $region13
    $region12: #{tpu_custom_call.1} parent=1 // pred_region
      _
    $region13: #{tpu_custom_call.1} parent=1 // pred_fallthru
      _
    // Predicated region
    $region14: #{tpu_custom_call.1} parent=1 // pred_check
      _
    $region15: #{tpu_custom_call.1} parent=1 // pred_check_branch
      %42 = sbr.rel (0) target = $region17
    $region16: #{tpu_custom_call.1} parent=1 // pred_region
      _
    $region17: #{tpu_custom_call.1} parent=1 // pred_fallthru
      _
    // Predicated region
    $region18: #{tpu_custom_call.1} parent=1 // pred_check
      _
    $region19: #{tpu_custom_call.1} parent=1 // pred_check_branch
      %44 = sbr.rel (0) target = $region21
    $region20: #{tpu_custom_call.1} parent=1 // pred_region
      _
    $region21: #{tpu_custom_call.1} parent=1 // pred_fallthru
      _
    // Predicated region
    $region22: #{tpu_custom_call.1} parent=1 // pred_check
      _
    $region23: #{tpu_custom_call.1} parent=1 // pred_check_branch
      %46 = sbr.rel (0) target = $region25
    $region24: #{tpu_custom_call.1} parent=1 // pred_region
      %48 = dma.done [#allocation3], 128
    $region25: #{tpu_custom_call.1} parent=1 // pred_fallthru
      _
    // Predicated region
    $region26: #{tpu_custom_call.1} parent=1 // pred_check
      _
    $region27: #{tpu_custom_call.1} parent=1 // pred_check_branch
      %50 = sbr.rel (0) target = $region29
    $region28: #{tpu_custom_call.1} parent=1 // pred_region
      %52 = dma.done [#allocation6], 256
    $region29: #{tpu_custom_call.1} parent=1 // pred_fallthru
      _
    %v54 = vld [vmem:[#allocation2] sm:$0xf]
    %v55 = vld [vmem:[#allocation2 + $0x4] sm:$0xf]
    %v56 = vld [vmem:[#allocation5] sm:$0xf]
    %v57 = vld [vmem:[#allocation5 + $0x4] sm:$0xf]
    %v58 = vld [vmem:[#allocation5 + $0x8] sm:$0xf]
    %v59 = vld [vmem:[#allocation5 + $0xc] sm:$0xf]
    %v60 = vld [vmem:[%s2] sm:$0x1]
    %v62 = vperm.slane %v60, 0
    %v66 = vunpack.c.l.b16 %v54
    %v67 = vunpack.c.l.b16 %v55
    %v68 = vpack.c.b16 %v67, %v66
    %v73 = vunpack.c.l.b16 %v56
    %v74 = vunpack.c.l.b16 %v57
    %v75 = vunpack.c.l.b16 %v58
    %v76 = vunpack.c.l.b16 %v59
    %v77 = vpack.c.b16 %v74, %v73
    %v78 = vpack.c.b16 %v76, %v75
    %vm81 = vcmask 261120
    %v83 = vsel %vm81, %v68, 0
    %85 = vmatpush.bf16.msra.mxu0 0
    %86 = vmatpush.bf16.msra.mxu0 0
    %87 = vmatpush.bf16.msra.mxu0 0
    %88 = vmatpush.bf16.msra.mxu0 0
    %89 = vmatpush.bf16.msra.mxu0 0
    %90 = vmatpush.bf16.msra.mxu0 0
    %91 = vmatpush.bf16.msra.mxu0 %v78
    %92 = vmatpush.bf16.msra.mxu0 %v77
    %93 = vmatmul.bf16.gmra.mxu0 %v83
    %v94 = vpop.f32.mrf.mxu0
    %v95 = vadd.f32 %v62, %v94
    %v96 = vpop.f32.mrf.mxu0
    %v97 = vadd.f32 %v62, %v96
    %98 = vdwg.mxu0
    %v99 = vmul.f32 %v95, 0.5
    %v100 = vmul.f32 %v97, 0.5
    %v101 = vmul.f32 %v95, 0.70710677
    %v102 = vmul.f32 %v97, 0.70710677
    %v103 = vmul.f32 %v101, %v101
    %v104 = vmin.f32 16.0, %v103
    %v105 = vmul.f32 %v104, 2.1237322e-06
    %v106 = vadd.f32 %v105, 0.00028619796
    %v107 = vmul.f32 %v104, %v106
    %v108 = vadd.f32 %v107, 0.0036580483
    %v109 = vmul.f32 %v104, %v108
    %v110 = vadd.f32 %v109, 0.05243302
    %v111 = vmul.f32 %v104, %v110
    %v112 = vadd.f32 %v111, 0.18741608
    %v113 = vmul.f32 %v104, %v112
    %v114 = vadd.f32 %v113, 1.1283791
    %v115 = vmul.f32 %v101, %v114
    %v116 = vmul.f32 %v104, 3.8918573e-05
    %v117 = vadd.f32 %v116, 0.001143296
    %v118 = vmul.f32 %v104, %v117
    %v119 = vadd.f32 %v118, 0.014752088
    %v120 = vmul.f32 %v104, %v119
    %v121 = vadd.f32 %v120, 0.112945676
    %v122 = vmul.f32 %v104, %v121
    %v123 = vadd.f32 %v122, 0.4994258
    %v124 = vmul.f32 %v104, %v123
    %v125 = vadd.f32 %v124, 1.0
    %v126 = vrcp.pop %v125
    %v127 = vmul.f32 %v125, %v126
    %v128 = vsub.f32 1.0, %v127
    %v129 = vmul.f32 %v126, %v128
    %v130 = vadd.f32 %v126, %v129
    %vm131 = vweird.f32 %v125
    %vm132 = vweird.f32 %v126
    %vm133 = vmor %vm131, %vm132
    %v134 = vsel %vm133, %v126, %v130
    %v135 = vand.u32 2147483647, %v125
    %vm136 = vcmp.eq.f32.partialorder %v135, 8.507059e+37
    %v137 = vand.u32 %v125, 2147483648
    %v138 = vor.u32 1.1754944e-38, %v137
    %v139 = vsel %vm136, %v138, %v134
    %v140 = vmul.f32 %v115, %v139
    %v141 = vmin.f32 %v140, 1.0
    %v142 = vmax.f32 %v141, -1.0
    %v143 = vmul.f32 %v102, %v102
    %v144 = vmin.f32 16.0, %v143
    %v145 = vmul.f32 %v144, 2.1237322e-06
    %v146 = vadd.f32 %v145, 0.00028619796
    %v147 = vmul.f32 %v144, %v146
    %v148 = vadd.f32 %v147, 0.0036580483
    %v149 = vmul.f32 %v144, %v148
    %v150 = vadd.f32 %v149, 0.05243302
    %v151 = vmul.f32 %v144, %v150
    %v152 = vadd.f32 %v151, 0.18741608
    %v153 = vmul.f32 %v144, %v152
    %v154 = vadd.f32 %v153, 1.1283791
    %v155 = vmul.f32 %v102, %v154
    %v156 = vmul.f32 %v144, 3.8918573e-05
    %v157 = vadd.f32 %v156, 0.001143296
    %v158 = vmul.f32 %v144, %v157
    %v159 = vadd.f32 %v158, 0.014752088
    %v160 = vmul.f32 %v144, %v159
    %v161 = vadd.f32 %v160, 0.112945676
    %v162 = vmul.f32 %v144, %v161
    %v163 = vadd.f32 %v162, 0.4994258
    %v164 = vmul.f32 %v144, %v163
    %v165 = vadd.f32 %v164, 1.0
    %v166 = vrcp.pop %v165
    %v167 = vmul.f32 %v165, %v166
    %v168 = vsub.f32 1.0, %v167
    %v169 = vmul.f32 %v166, %v168
    %v170 = vadd.f32 %v166, %v169
    %vm171 = vweird.f32 %v165
    %vm172 = vweird.f32 %v166
    %vm173 = vmor %vm171, %vm172
    %v174 = vsel %vm173, %v166, %v170
    %v175 = vand.u32 2147483647, %v165
    %vm176 = vcmp.eq.f32.partialorder %v175, 8.507059e+37
    %v177 = vand.u32 %v165, 2147483648
    %v178 = vor.u32 1.1754944e-38, %v177
    %v179 = vsel %vm176, %v178, %v174
    %v180 = vmul.f32 %v155, %v179
    %v181 = vmin.f32 %v180, 1.0
    %v182 = vmax.f32 %v181, -1.0
    %v183 = vadd.f32 %v142, 1.0
    %v184 = vadd.f32 %v182, 1.0
    %v185 = vmul.f32 %v99, %v183
    %v186 = vmul.f32 %v100, %v184
    %v187 = vsel %vm81, %v185, 0.0
    %188 = vadd.xlane.f32.xlu0 %v187
    %v189 = vpop.xlane.xlu0 %188
    %v190 = vsel %vm81, %v186, 0.0
    %191 = vadd.xlane.f32.xlu0 %v190
    %v192 = vpop.xlane.xlu0 %191
    %v193 = vrcp.pop 32.0
    %v194 = vmul.f32 32.0, %v193
    %v195 = vsub.f32 1.0, %v194
    %v196 = vmul.f32 %v193, %v195
    %v197 = vadd.f32 %v193, %v196
    %vm198 = vweird.f32 %v193
    %v199 = vsel %vm198, %v193, %v197
    %v200 = vmul.f32 %v189, %v199
    %v201 = vmul.f32 %v192, %v199
    %v202 = vsub.f32 %v185, %v200
    %v203 = vsub.f32 %v186, %v201
    %v204 = vmul.f32 %v202, %v202
    %v205 = vmul.f32 %v203, %v203
    %v206 = vsel %vm81, %v204, 0.0
    %207 = vadd.xlane.f32.xlu0 %v206
    %v208 = vpop.xlane.xlu0 %207
    %v209 = vsel %vm81, %v205, 0.0
    %210 = vadd.xlane.f32.xlu0 %v209
    %v211 = vpop.xlane.xlu0 %210
    %v212 = vmul.f32 %v208, %v199
    %v213 = vmul.f32 %v211, %v199
    %v214 = vadd.f32 %v212, 1e-05
    %v215 = vadd.f32 %v213, 1e-05
    %v216 = vrsqrt.pop %v214
    %v217 = vmul.f32 %v216, %v214
    %v218 = vmul.f32 %v217, %v216
    %v219 = vmul.f32 0.5, %v218
    %v220 = vsub.f32 1.5, %v219
    %v221 = vmul.f32 %v216, %v220
    %vm222 = vweird.f32 %v214
    %vm223 = vweird.f32 %v216
    %vm224 = vmor %vm222, %vm223
    %v225 = vsel %vm224, %v216, %v221
    %v226 = vrsqrt.pop %v215
    %v227 = vmul.f32 %v226, %v215
    %v228 = vmul.f32 %v227, %v226
    %v229 = vmul.f32 0.5, %v228
    %v230 = vsub.f32 1.5, %v229
    %v231 = vmul.f32 %v226, %v230
    %vm232 = vweird.f32 %v215
    %vm233 = vweird.f32 %v226
    %vm234 = vmor %vm232, %vm233
    %v235 = vsel %vm234, %v226, %v231
    %v236 = vmul.f32 %v202, %v225
    %v237 = vmul.f32 %v203, %v235
    %v238 = vld [vmem:[%s3] sm:$0x1]
    %v240 = vperm.slane %v238, 0
    %v242 = vmul.f32 %v236, %v240
    %v243 = vmul.f32 %v237, %v240
    %v244 = vld [vmem:[%s4] sm:$0x1]
    %v246 = vperm.slane %v244, 0
    %v248 = vadd.f32 %v242, %v246
    %v249 = vadd.f32 %v243, %v246
    %v250 = vpack.c.bf16 %v248, %v248
    %v251 = vpack.c.bf16 %v249, %v249
    %vm252 = vcmask 257024
    %253 = vst.msk [vmem:[#allocation7] sm:$0xf] %vm252, %v250
    %254 = vst.msk [vmem:[#allocation7 + $0x4] sm:$0xf] %vm252, %v251
    // Predicated region
    $region30: #{tpu_custom_call.1} parent=1 // pred_check
      _
    $region31: #{tpu_custom_call.1} parent=1 // pred_check_branch
      %256 = sbr.rel (0) target = $region33
    $region32: #{tpu_custom_call.1} parent=1 // pred_region
      %258 = vsyncadd [#allocation4], 0
      %s259 = sshll.u32 [#allocation7], 4
      %s260 = int_to_ptr.vmem [resolvable:$true] %s259
      %s261 = sshll.u32 %s5, 4
      %s262 = int_to_ptr.hbm [resolvable:$true] %s261
      %267 = dma.vmem_to_hbm [thread:$0]  %s260, 128, %s262, [#allocation4], 64, 64, 4
    $region33: #{tpu_custom_call.1} parent=1 // pred_fallthru
      _
    // Predicated region
    $region34: #{tpu_custom_call.1} parent=1 // pred_check
      _
    $region35: #{tpu_custom_call.1} parent=1 // pred_check_branch
      %269 = sbr.rel (0) target = $region37
    $region36: #{tpu_custom_call.1} parent=1 // pred_region
      %271 = dma.done [#allocation4], 128
    $region37: #{tpu_custom_call.1} parent=1 // pred_fallthru
      _
    %272 = vsyncpa [#allocation3], 1
    %273 = vsyncpa [#allocation6], 1
    %274 = vsyncpa [#allocation4], 1

</llo_original>
